<compile_context>
chip_gen: v7x
topology: tpu7x:2x2x1
jax: 0.10.0
libtpu: 0.0.40
codegen_flags: <defaults>
</compile_context>

<pallas_src>
import jax
import jax.numpy as jnp
from jax.experimental import pallas as pl
from jax.experimental.pallas import tpu as pltpu

BATCH = 2
SEQ = 50           # fixed by the module's docstring (seq_length = 50)
NUM_FEATURES = 8   # sensor features (x has NUM_FEATURES + 1 columns)
CONV_CH = 16       # classifier conv channels
HIDDEN = 32        # per-branch regressor hidden width
KSIZE = 3          # classifier conv kernel size (padding = 1)
NUM_CLASSES = 2    # healthy / unhealthy

PATCH_K = KSIZE * NUM_FEATURES   # 24  : fused im2col contraction dim
FLAT = SEQ * NUM_FEATURES        # 400 : flattened sensor dim
H2 = 2 * HIDDEN                  # 64  : healthy||unhealthy fused hidden
BS = BATCH * SEQ                 # 100 : lane-dense "token" dim

# Row layout of the packed (24, 128) "small" slab (single DMA for all small tensors)
ROW_B1 = 0        # [:H2]           concat(h_b1, u_b1)
ROW_W2H = 1       # [:HIDDEN]       h_w2 column (rest zero)
ROW_W2U = 2       # [HIDDEN:H2]     u_w2 column (rest zero)
ROW_SCAL = 3      # [0]=h_b2, [1]=u_b2, [2]=fc_b[1]-fc_b[0]
ROW_FCD = 4       # [:CONV_CH]      fc_w[:,1] - fc_w[:,0]  (logit-difference row)
ROW_CONV = 8      # rows 8..23: [:PATCH_K]=fused conv weight (C,K*F), [PATCH_K]=conv bias
SMALL_ROWS = ROW_CONV + CONV_CH   # 24


def hybrid_kernel(patches_ref, flat_ref, w1_ref, small_ref, o_ref):
    # ---- classifier: fused 3-tap conv as ONE lane-dense (C,K*F)@(K*F,B*S) matmul ----
    conv = jnp.dot(small_ref[ROW_CONV:ROW_CONV + CONV_CH, 0:PATCH_K],
                   patches_ref[...],
                   preferred_element_type=jnp.float32)                     # [C, B*S]
    conv = jnp.maximum(
        conv + small_ref[ROW_CONV:ROW_CONV + CONV_CH, PATCH_K:PATCH_K + 1], 0.0)

    # 2-class head folded into a single logit-difference projection:
    #   dlogit_b = mean_s( sum_c conv[c, b*S+s] * (fc_w[c,1]-fc_w[c,0]) ) + (fc_b1 - fc_b0)
    proj = jnp.dot(small_ref[ROW_FCD:ROW_FCD + 1, 0:CONV_CH], conv,
                   preferred_element_type=jnp.float32)                     # [1, B*S]
    lane = jax.lax.broadcasted_iota(jnp.int32, (1, BS), 1)
    in_b0 = lane < SEQ                                                     # batch-0 segment mask
    db = small_ref[ROW_SCAL:ROW_SCAL + 1, 2:3]                             # [1,1]
    dl0 = jnp.sum(jnp.where(in_b0, proj, 0.0), axis=1, keepdims=True) * (1.0 / SEQ) + db
    dl1 = jnp.sum(jnp.where(in_b0, 0.0, proj), axis=1, keepdims=True) * (1.0 / SEQ) + db
    row = jax.lax.broadcasted_iota(jnp.int32, (BATCH, 1), 0)
    # ties -> class 0, matching torch.argmax first-index semantics
    mask = (jnp.where(row == 0, dl0, dl1) > 0.0).astype(jnp.float32)       # [B, 1]

    # ---- fused healthy||unhealthy regressors: one matmul + one ReLU ----
    h = jnp.dot(flat_ref[...], w1_ref[...],
                preferred_element_type=jnp.float32)                        # [B, 2H]
    h = jnp.maximum(h + small_ref[ROW_B1:ROW_B1 + 1, 0:H2], 0.0)
    # second linears as masked lane reductions (w2 columns are zero-padded so each
    # branch only sees its own half of the fused hidden)
    out_h = jnp.sum(h * small_ref[ROW_W2H:ROW_W2H + 1, 0:H2], axis=1, keepdims=True) \
        + small_ref[ROW_SCAL:ROW_SCAL + 1, 0:1]
    out_u = jnp.sum(h * small_ref[ROW_W2U:ROW_W2U + 1, 0:H2], axis=1, keepdims=True) \
        + small_ref[ROW_SCAL:ROW_SCAL + 1, 1:2]

    out = mask * out_h + (1.0 - mask) * out_u                              # [B, 1]
    # lane-dense unmasked store; wrapper slices [:, :1]
    o_ref[...] = jnp.broadcast_to(out, (BATCH, 128))


def hybrid_forward(x_nchw, packed):
    """x_nchw: [B, 1, SEQ, F+1] (PyTorch NCHW). Returns [B, 1]."""
    x3 = x_nchw[:, 0, :, :].astype(jnp.float32)                  # [B, SEQ, F+1]
    sensor = x3[:, :, :NUM_FEATURES]          # health column dropped (unused in ref)
    flat = sensor.reshape(BATCH, FLAT)                           # [B, S*F]
    # transposed im2col for the pad=1, k=3 conv: (K*F, B*S) so the long dim is lane-dense
    padded = jnp.pad(sensor, ((0, 0), (1, 1), (0, 0)))           # [B, S+2, F]
    patches_t = jnp.concatenate(
        [padded[:, k:k + SEQ, :].reshape(BS, NUM_FEATURES) for k in range(KSIZE)],
        axis=1).T                                                # [K*F, B*S] = (24, 100)

    out = pl.pallas_call(
        hybrid_kernel,
        out_shape=jax.ShapeDtypeStruct((BATCH, 128), jnp.float32),
        in_specs=[pl.BlockSpec(memory_space=pltpu.MemorySpace.VMEM)] * 4,
        out_specs=pl.BlockSpec(memory_space=pltpu.MemorySpace.VMEM),
    )(patches_t, flat, packed['w1'], packed['small'])
    return out[:, :1]


def make_params(key):
    ks = jax.random.split(key, 10)
    s = 0.1
    return {
        # classifier conv stored [K, F, C] (PyTorch Conv1d weight [C, F, K] transposed)
        'conv_w': s * jax.random.normal(ks[0], (KSIZE, NUM_FEATURES, CONV_CH), jnp.float32),
        'conv_b': s * jax.random.normal(ks[1], (CONV_CH,), jnp.float32),
        'fc_w': s * jax.random.normal(ks[2], (CONV_CH, NUM_CLASSES), jnp.float32),
        'fc_b': s * jax.random.normal(ks[3], (NUM_CLASSES,), jnp.float32),
        # healthy regressor
        'h_w1': s * jax.random.normal(ks[4], (FLAT, HIDDEN), jnp.float32),
        'h_b1': s * jax.random.normal(ks[5], (HIDDEN,), jnp.float32),
        'h_w2': s * jax.random.normal(ks[6], (HIDDEN, 1), jnp.float32),
        'h_b2': 0.5,
        # unhealthy regressor
        'u_w1': s * jax.random.normal(ks[7], (FLAT, HIDDEN), jnp.float32),
        'u_b1': s * jax.random.normal(ks[8], (HIDDEN,), jnp.float32),
        'u_w2': s * jax.random.normal(ks[9], (HIDDEN, 1), jnp.float32),
        'u_b2': -0.5,
    }


def pack_params(p):
    """Fuse / pack weights so the kernel needs only 2 weight DMAs (w1 + slab)."""
    small = jnp.zeros((SMALL_ROWS, 128), jnp.float32)
    small = small.at[ROW_B1, :H2].set(jnp.concatenate([p['h_b1'], p['u_b1']]))
    small = small.at[ROW_W2H, :HIDDEN].set(p['h_w2'][:, 0])
    small = small.at[ROW_W2U, HIDDEN:H2].set(p['u_w2'][:, 0])
    small = small.at[ROW_SCAL, 0].set(p['h_b2'])
    small = small.at[ROW_SCAL, 1].set(p['u_b2'])
    small = small.at[ROW_SCAL, 2].set(p['fc_b'][1] - p['fc_b'][0])
    small = small.at[ROW_FCD, :CONV_CH].set(p['fc_w'][:, 1] - p['fc_w'][:, 0])
    # classifier conv fused to (C, K*F), column index = k*F + f; bias in column PATCH_K
    wconv = p['conv_w'].reshape(PATCH_K, CONV_CH).T                 # [C, K*F]
    small = small.at[ROW_CONV:ROW_CONV + CONV_CH, :PATCH_K].set(wconv)
    small = small.at[ROW_CONV:ROW_CONV + CONV_CH, PATCH_K].set(p['conv_b'])
    return {
        'w1': jnp.concatenate([p['h_w1'], p['u_w1']], axis=1),      # [S*F, 2H]
        'small': small,                                             # [24, 128]
    }


def reference_forward(x_nchw, p):
    """Pure-JAX reference of the original (unfused) forward, full f32 precision."""
    pr = jax.lax.Precision.HIGHEST
    x3 = x_nchw[:, 0, :, :]
    sensor = x3[:, :, :NUM_FEATURES]
    B, S, _ = sensor.shape
    padded = jnp.pad(sensor, ((0, 0), (1, 1), (0, 0)))
    acc = sum(jnp.einsum('btf,fc->btc', padded[:, k:k + S, :], p['conv_w'][k], precision=pr)
              for k in range(KSIZE))
    conv = jax.nn.relu(acc + p['conv_b'][None, None, :])
    logits = jnp.dot(jnp.mean(conv, axis=1), p['fc_w'], precision=pr) + p['fc_b'][None, :]
    mask = jnp.argmax(logits, axis=1).astype(jnp.float32)[:, None]
    flat = sensor.reshape(B, S * NUM_FEATURES)
    out_h = jnp.dot(jax.nn.relu(jnp.dot(flat, p['h_w1'], precision=pr) + p['h_b1']),
                    p['h_w2'], precision=pr) + p['h_b2']
    out_u = jnp.dot(jax.nn.relu(jnp.dot(flat, p['u_w1'], precision=pr) + p['u_b1']),
                    p['u_w2'], precision=pr) + p['u_b2']
    return mask * out_h + (1.0 - mask) * out_u


if __name__ == "__main__":
    key = jax.random.PRNGKey(0)
    kx, kp = jax.random.split(key)
    x = jax.random.normal(kx, (BATCH, 1, SEQ, NUM_FEATURES + 1), jnp.float32)
    params = make_params(kp)
    packed = pack_params(params)

    out = jax.jit(hybrid_forward)(x, packed)
    out = jax.block_until_ready(out)

    ref = reference_forward(x, params)
    assert out.shape == (BATCH, 1)
    assert jnp.allclose(out, ref, atol=1e-3, rtol=1e-3), (out, ref)

    print("KERNEL_OK")
</pallas_src>

<mosaic_0001>
module attributes {stable_mosaic.version = 11 : i64} {
  func.func @hybrid_kernel(%arg0: memref<24x100xf32, #tpu.memory_space<vmem>>, %arg1: memref<2x400xf32, #tpu.memory_space<vmem>>, %arg2: memref<400x64xf32, #tpu.memory_space<vmem>>, %arg3: memref<24x128xf32, #tpu.memory_space<vmem>>, %arg4: memref<2x128xf32, #tpu.memory_space<vmem>>) attributes {dimension_semantics = [], scalar_prefetch = 0 : i64, scratch_operands = 0 : i64, tpu.core_type = #tpu.core_type<tc>} {
    %c8 = arith.constant 8 : index
    %c0 = arith.constant 0 : index
    %0 = vector.load %arg3[%c8, %c0] : memref<24x128xf32, #tpu.memory_space<vmem>>, vector<16x24xf32>
    %c0_0 = arith.constant 0 : index
    %c0_1 = arith.constant 0 : index
    %1 = vector.load %arg0[%c0_0, %c0_1] : memref<24x100xf32, #tpu.memory_space<vmem>>, vector<24x100xf32>
    %cst = arith.constant dense<0.000000e+00> : vector<16x100xf32>
    %2 = tpu.matmul %0, %1, %cst {dimension_numbers = #tpu.dot_dimension_numbers<[1], [0], [0], [1], [0, 0, 1, 1], [], []>} : vector<16x24xf32>, vector<24x100xf32>, vector<16x100xf32> -> vector<16x100xf32>
    %c8_2 = arith.constant 8 : index
    %c24 = arith.constant 24 : index
    %3 = vector.load %arg3[%c8_2, %c24] : memref<24x128xf32, #tpu.memory_space<vmem>>, vector<16x1xf32>
    %4 = vector.broadcast %3 : vector<16x1xf32> to vector<16x100xf32>
    %5 = arith.addf %2, %4 : vector<16x100xf32>
    %cst_3 = arith.constant 0.000000e+00 : f32
    %6 = vector.broadcast %cst_3 : f32 to vector<16x100xf32>
    %7 = arith.maximumf %5, %6 : vector<16x100xf32>
    %c4 = arith.constant 4 : index
    %c0_4 = arith.constant 0 : index
    %8 = vector.load %arg3[%c4, %c0_4] : memref<24x128xf32, #tpu.memory_space<vmem>>, vector<1x16xf32>
    %cst_5 = arith.constant dense<0.000000e+00> : vector<1x100xf32>
    %9 = tpu.matmul %8, %7, %cst_5 {dimension_numbers = #tpu.dot_dimension_numbers<[1], [0], [0], [1], [0, 0, 1, 1], [], []>} : vector<1x16xf32>, vector<16x100xf32>, vector<1x100xf32> -> vector<1x100xf32>
    %10 = tpu.iota {dimensions = array<i32: 1>} : vector<1x100xi32>
    %c50_i32 = arith.constant 50 : i32
    %11 = vector.broadcast %c50_i32 : i32 to vector<1x100xi32>
    %12 = arith.cmpi slt, %10, %11 : vector<1x100xi32>
    %c3 = arith.constant 3 : index
    %c2 = arith.constant 2 : index
    %13 = vector.load %arg3[%c3, %c2] : memref<24x128xf32, #tpu.memory_space<vmem>>, vector<1x1xf32>
    %cst_6 = arith.constant 0.000000e+00 : f32
    %14 = vector.broadcast %cst_6 : f32 to vector<1x100xf32>
    %15 = arith.select %12, %9, %14 : vector<1x100xi1>, vector<1x100xf32>
    %cst_7 = arith.constant dense<0.000000e+00> : vector<1xf32>
    %16 = vector.multi_reduction <add>, %15, %cst_7 [1] : vector<1x100xf32> to vector<1xf32>
    %17 = vector.shape_cast %16 : vector<1xf32> to vector<1x1xf32>
    %cst_8 = arith.constant 2.000000e-02 : f32
    %18 = vector.broadcast %cst_8 : f32 to vector<1x1xf32>
    %19 = arith.mulf %17, %18 : vector<1x1xf32>
    %20 = arith.addf %19, %13 : vector<1x1xf32>
    %cst_9 = arith.constant 0.000000e+00 : f32
    %21 = vector.broadcast %cst_9 : f32 to vector<1x100xf32>
    %22 = arith.select %12, %21, %9 : vector<1x100xi1>, vector<1x100xf32>
    %cst_10 = arith.constant dense<0.000000e+00> : vector<1xf32>
    %23 = vector.multi_reduction <add>, %22, %cst_10 [1] : vector<1x100xf32> to vector<1xf32>
    %24 = vector.shape_cast %23 : vector<1xf32> to vector<1x1xf32>
    %cst_11 = arith.constant 2.000000e-02 : f32
    %25 = vector.broadcast %cst_11 : f32 to vector<1x1xf32>
    %26 = arith.mulf %24, %25 : vector<1x1xf32>
    %27 = arith.addf %26, %13 : vector<1x1xf32>
    %28 = tpu.iota {dimensions = array<i32: 0>} : vector<2x1xi32>
    %c0_i32 = arith.constant 0 : i32
    %29 = vector.broadcast %c0_i32 : i32 to vector<2x1xi32>
    %30 = arith.cmpi eq, %28, %29 : vector<2x1xi32>
    %31 = vector.shape_cast %20 : vector<1x1xf32> to vector<1x1xf32>
    %32 = vector.broadcast %31 : vector<1x1xf32> to vector<2x1xf32>
    %33 = vector.shape_cast %27 : vector<1x1xf32> to vector<1x1xf32>
    %34 = vector.broadcast %33 : vector<1x1xf32> to vector<2x1xf32>
    %35 = arith.select %30, %32, %34 : vector<2x1xi1>, vector<2x1xf32>
    %cst_12 = arith.constant 0.000000e+00 : f32
    %36 = vector.broadcast %cst_12 : f32 to vector<2x1xf32>
    %37 = arith.cmpf ogt, %35, %36 : vector<2x1xf32>
    %38 = arith.extui %37 : vector<2x1xi1> to vector<2x1xi32>
    %39 = arith.sitofp %38 : vector<2x1xi32> to vector<2x1xf32>
    %c0_13 = arith.constant 0 : index
    %c0_14 = arith.constant 0 : index
    %40 = vector.load %arg1[%c0_13, %c0_14] : memref<2x400xf32, #tpu.memory_space<vmem>>, vector<2x400xf32>
    %c0_15 = arith.constant 0 : index
    %c0_16 = arith.constant 0 : index
    %41 = vector.load %arg2[%c0_15, %c0_16] : memref<400x64xf32, #tpu.memory_space<vmem>>, vector<400x64xf32>
    %cst_17 = arith.constant dense<0.000000e+00> : vector<2x64xf32>
    %42 = tpu.matmul %40, %41, %cst_17 {dimension_numbers = #tpu.dot_dimension_numbers<[1], [0], [0], [1], [0, 0, 1, 1], [], []>} : vector<2x400xf32>, vector<400x64xf32>, vector<2x64xf32> -> vector<2x64xf32>
    %c0_18 = arith.constant 0 : index
    %c0_19 = arith.constant 0 : index
    %43 = vector.load %arg3[%c0_18, %c0_19] : memref<24x128xf32, #tpu.memory_space<vmem>>, vector<1x64xf32>
    %44 = vector.broadcast %43 : vector<1x64xf32> to vector<2x64xf32>
    %45 = arith.addf %42, %44 : vector<2x64xf32>
    %cst_20 = arith.constant 0.000000e+00 : f32
    %46 = vector.broadcast %cst_20 : f32 to vector<2x64xf32>
    %47 = arith.maximumf %45, %46 : vector<2x64xf32>
    %c1 = arith.constant 1 : index
    %c0_21 = arith.constant 0 : index
    %48 = vector.load %arg3[%c1, %c0_21] : memref<24x128xf32, #tpu.memory_space<vmem>>, vector<1x64xf32>
    %49 = vector.broadcast %48 : vector<1x64xf32> to vector<2x64xf32>
    %50 = arith.mulf %47, %49 : vector<2x64xf32>
    %cst_22 = arith.constant dense<0.000000e+00> : vector<2xf32>
    %51 = vector.multi_reduction <add>, %50, %cst_22 [1] : vector<2x64xf32> to vector<2xf32>
    %52 = vector.shape_cast %51 : vector<2xf32> to vector<2x1xf32>
    %c3_23 = arith.constant 3 : index
    %c0_24 = arith.constant 0 : index
    %53 = vector.load %arg3[%c3_23, %c0_24] : memref<24x128xf32, #tpu.memory_space<vmem>>, vector<1x1xf32>
    %54 = vector.broadcast %53 : vector<1x1xf32> to vector<2x1xf32>
    %55 = arith.addf %52, %54 : vector<2x1xf32>
    %c2_25 = arith.constant 2 : index
    %c0_26 = arith.constant 0 : index
    %56 = vector.load %arg3[%c2_25, %c0_26] : memref<24x128xf32, #tpu.memory_space<vmem>>, vector<1x64xf32>
    %57 = vector.broadcast %56 : vector<1x64xf32> to vector<2x64xf32>
    %58 = arith.mulf %47, %57 : vector<2x64xf32>
    %cst_27 = arith.constant dense<0.000000e+00> : vector<2xf32>
    %59 = vector.multi_reduction <add>, %58, %cst_27 [1] : vector<2x64xf32> to vector<2xf32>
    %60 = vector.shape_cast %59 : vector<2xf32> to vector<2x1xf32>
    %c3_28 = arith.constant 3 : index
    %c1_29 = arith.constant 1 : index
    %61 = vector.load %arg3[%c3_28, %c1_29] : memref<24x128xf32, #tpu.memory_space<vmem>>, vector<1x1xf32>
    %62 = vector.broadcast %61 : vector<1x1xf32> to vector<2x1xf32>
    %63 = arith.addf %60, %62 : vector<2x1xf32>
    %64 = arith.mulf %39, %55 : vector<2x1xf32>
    %cst_30 = arith.constant 1.000000e+00 : f32
    %65 = vector.broadcast %cst_30 : f32 to vector<2x1xf32>
    %66 = arith.subf %65, %39 : vector<2x1xf32>
    %67 = arith.mulf %66, %63 : vector<2x1xf32>
    %68 = arith.addf %64, %67 : vector<2x1xf32>
    %69 = vector.shape_cast %68 : vector<2x1xf32> to vector<2x1xf32>
    %70 = vector.broadcast %69 : vector<2x1xf32> to vector<2x128xf32>
    %c0_31 = arith.constant 0 : index
    %c0_32 = arith.constant 0 : index
    %71 = vector.load %arg4[%c0_31, %c0_32] : memref<2x128xf32, #tpu.memory_space<vmem>>, vector<2x128xf32>
    tpu.vector_store %arg4[%c0_31, %c0_32], %70 {strides = array<i32>} : memref<2x128xf32, #tpu.memory_space<vmem>>, vector<2x128xf32>,
    return
  }
}

</mosaic_0001>

<llo_original>
// kernel: hybrid_forward.1
$region0: #{hybrid_forward.1}
  #allocation0 [shape = 'u32[]', space=smem, size = 0x4, offset = 0x4, fixed_abs, tag = 'smem constant byte address 0x4 - core index']
  #allocation1 [shape = 'u32[144,128]{1,0:T(1,128)}', space=vmem, size = 0x12000, scoped, tag = 'internal scratch']
  %s0 = inlined_call_operand.vmem [shape: f32[24,100], index: 0, kind: input, shape index: {}]
  %s1 = inlined_call_operand.vmem [shape: f32[2,400], index: 1, kind: input, shape index: {}]
  %s2 = inlined_call_operand.vmem [shape: f32[400,64], index: 2, kind: input, shape index: {}]
  %s3 = inlined_call_operand.vmem [shape: f32[24,128], index: 3, kind: input, shape index: {}]
  %s4 = inlined_call_operand.vmem [shape: f32[2,128], index: 4, kind: output, shape index: {}]
  %s5 = sld [smem:[#allocation0]]
  $region26: #{hybrid_forward.1} parent=0
    _
  %s7 = ssub.s32 1, %s5
  %s8 = scalar_select 0, %s7, %s5
  // Predicated region
  $region2: #{hybrid_forward.1} parent=0 // pred_check
    _
  $region3: #{hybrid_forward.1} parent=0 // pred_check_branch
    %10 = sbr.rel (0) target = $region5
  $region4: #{hybrid_forward.1} parent=0 // pred_region
    _
  $region5: #{hybrid_forward.1} parent=0 // pred_fallthru
    _
  // Predicated region
  $region6: #{hybrid_forward.1} parent=0 // pred_check
    _
  $region7: #{hybrid_forward.1} parent=0 // pred_check_branch
    %12 = sbr.rel (0) target = $region9
  $region8: #{hybrid_forward.1} parent=0 // pred_region
    _
  $region9: #{hybrid_forward.1} parent=0 // pred_fallthru
    _
  // Predicated region
  $region10: #{hybrid_forward.1} parent=0 // pred_check
    _
  $region11: #{hybrid_forward.1} parent=0 // pred_check_branch
    %14 = sbr.rel (0) target = $region13
  $region12: #{hybrid_forward.1} parent=0 // pred_region
    _
  $region13: #{hybrid_forward.1} parent=0 // pred_fallthru
    _
  // Predicated region
  $region14: #{hybrid_forward.1} parent=0 // pred_check
    _
  $region15: #{hybrid_forward.1} parent=0 // pred_check_branch
    %16 = sbr.rel (0) target = $region17
  $region16: #{hybrid_forward.1} parent=0 // pred_region
    _
  $region17: #{hybrid_forward.1} parent=0 // pred_fallthru
    _
  %v17 = vld [vmem:[%s3 + $0x8] sm:$0xff]
  %v18 = vld [vmem:[%s3 + $0x10] sm:$0xff]
  %v19 = vld [vmem:[%s0] sm:$0xff]
  %v20 = vld [vmem:[%s0 + $0x8] sm:$0xff]
  %v21 = vld [vmem:[%s0 + $0x10] sm:$0xff]
  %23 = vset.pattern.permute.xlu0 24
  %24 = vperm.xlu0 %23, %v17
  %v25 = vpop.permute.xlu0 %24
  %28 = vset.pattern.permute.xlu0 24
  %29 = vperm.xlu0 %28, %v18
  %v30 = vpop.permute.xlu0 %29
  %vm32 = vcmask 195584
  %v33 = vsel %vm32, %v17, 0
  %v35 = vsel %vm32, %v18, 0
  %37 = vmatprep.subr.mxu0 0.0
  %38 = vmatpush1.msra.mxu0 %v19
  %39 = vmatprep.subr.mxu0 0.0
  %40 = vmatpush1.msra.mxu0 %v20
  %41 = vmatprep.subr.mxu0 0.0
  %42 = vmatpush1.msra.mxu0 %v21
  %43 = vmatprep.subr.mxu0 0.0
  %44 = vmatpush1.msra.mxu0 0.0
  %45 = vmatprep.subr.mxu0 0.0
  %46 = vmatpush1.msra.mxu0 0.0
  %47 = vmatprep.subr.mxu0 0.0
  %48 = vmatpush1.msra.mxu0 0.0
  %49 = vmatprep.subr.mxu0 0.0
  %50 = vmatpush1.msra.mxu0 0.0
  %51 = vmatprep.subr.mxu0 0.0
  %52 = vmatpush1.msra.mxu0 0.0
  %53 = vmatprep.subr.mxu0 0.0
  %54 = vmatpush1.msra.mxu0 0.0
  %55 = vmatprep.subr.mxu0 0.0
  %56 = vmatpush1.msra.mxu0 0.0
  %57 = vmatprep.subr.mxu0 0.0
  %58 = vmatpush1.msra.mxu0 0.0
  %59 = vmatprep.subr.mxu0 0.0
  %60 = vmatpush1.msra.mxu0 0.0
  %61 = vmatprep.subr.mxu0 0.0
  %62 = vmatpush1.msra.mxu0 0.0
  %63 = vmatprep.subr.mxu0 0.0
  %64 = vmatpush1.msra.mxu0 0.0
  %65 = vmatprep.subr.mxu0 0.0
  %66 = vmatpush1.msra.mxu0 0.0
  %67 = vmatprep.subr.mxu0 0.0
  %68 = vmatpush1.msra.mxu0 0.0
  %69 = vmatprep.subr.mxu0 0.0
  %70 = vmatpush1.msra.mxu0 0.0
  %71 = vmatprep.subr.mxu0 0.0
  %72 = vmatpush1.msra.mxu0 0.0
  %73 = vmatprep.subr.mxu0 0.0
  %74 = vmatpush1.msra.mxu0 0.0
  %75 = vmatprep.subr.mxu0 0.0
  %76 = vmatpush1.msra.mxu0 0.0
  %77 = vmatprep.subr.mxu0 0.0
  %78 = vmatpush1.msra.mxu0 0.0
  %79 = vmatprep.subr.mxu0 0.0
  %80 = vmatpush1.msra.mxu0 0.0
  %81 = vmatprep.subr.mxu0 0.0
  %82 = vmatpush1.msra.mxu0 0.0
  %83 = vmatprep.subr.mxu0 0.0
  %84 = vmatpush1.msra.mxu0 0.0
  %85 = vmatprep.subr.mxu0 0.0
  %86 = vmatpush1.msra.mxu0 0.0
  %87 = vmatprep.subr.mxu0 0.0
  %88 = vmatpush1.msra.mxu0 0.0
  %89 = vmatprep.subr.mxu0 0.0
  %90 = vmatpush1.msra.mxu0 0.0
  %91 = vmatprep.subr.mxu0 0.0
  %92 = vmatpush1.msra.mxu0 0.0
  %93 = vmatprep.subr.mxu0 0.0
  %94 = vmatpush1.msra.mxu0 0.0
  %95 = vmatprep.subr.mxu0 0.0
  %96 = vmatpush1.msra.mxu0 0.0
  %97 = vmatprep.subr.mxu0 0.0
  %98 = vmatpush1.msra.mxu0 0.0
  %99 = vmatprep.subr.mxu0 0.0
  %100 = vmatpush1.msra.mxu0 0.0
  %101 = vmatprep.mubr.f32.mxu0 0.0
  %102 = vmatmul.mubr.f32.gmra.mrb[0].mxu0 %v33
  %v103 = vpop.f32.mrb[0].mxu0
  %v104 = vadd.f32 %v25, %v103
  %v105 = vpop.f32.mrb[0].mxu0
  %106 = vmatprep.mubr.f32.mxu0 0.0
  %107 = vmatmul.mubr.f32.gmra.mrb[0].mxu0 %v35
  %v108 = vpop.f32.mrb[0].mxu0
  %v109 = vadd.f32 %v30, %v108
  %v110 = vpop.f32.mrb[0].mxu0
  %111 = vdwg.mxu0
  %v112 = vmax.f32 %v104, 0.0
  %v113 = vmax.f32 %v109, 0.0
  %v114 = vld [vmem:[%s3 + $0x4] sm:$0x1]
  %vm115 = vcmask 130048
  %v117 = vsel %vm115, %v114, 0
  %119 = vmatprep.subr.mxu0 0.0
  %120 = vmatpush1.msra.mxu0 %v112
  %121 = vmatprep.subr.mxu0 0.0
  %122 = vmatpush1.msra.mxu0 %v113
  %123 = vmatprep.subr.mxu0 0.0
  %124 = vmatpush1.msra.mxu0 0.0
  %125 = vmatprep.subr.mxu0 0.0
  %126 = vmatpush1.msra.mxu0 0.0
  %127 = vmatprep.subr.mxu0 0.0
  %128 = vmatpush1.msra.mxu0 0.0
  %129 = vmatprep.subr.mxu0 0.0
  %130 = vmatpush1.msra.mxu0 0.0
  %131 = vmatprep.subr.mxu0 0.0
  %132 = vmatpush1.msra.mxu0 0.0
  %133 = vmatprep.subr.mxu0 0.0
  %134 = vmatpush1.msra.mxu0 0.0
  %135 = vmatprep.subr.mxu0 0.0
  %136 = vmatpush1.msra.mxu0 0.0
  %137 = vmatprep.subr.mxu0 0.0
  %138 = vmatpush1.msra.mxu0 0.0
  %139 = vmatprep.subr.mxu0 0.0
  %140 = vmatpush1.msra.mxu0 0.0
  %141 = vmatprep.subr.mxu0 0.0
  %142 = vmatpush1.msra.mxu0 0.0
  %143 = vmatprep.subr.mxu0 0.0
  %144 = vmatpush1.msra.mxu0 0.0
  %145 = vmatprep.subr.mxu0 0.0
  %146 = vmatpush1.msra.mxu0 0.0
  %147 = vmatprep.subr.mxu0 0.0
  %148 = vmatpush1.msra.mxu0 0.0
  %149 = vmatprep.subr.mxu0 0.0
  %150 = vmatpush1.msra.mxu0 0.0
  %151 = vmatprep.subr.mxu0 0.0
  %152 = vmatpush1.msra.mxu0 0.0
  %153 = vmatprep.subr.mxu0 0.0
  %154 = vmatpush1.msra.mxu0 0.0
  %155 = vmatprep.subr.mxu0 0.0
  %156 = vmatpush1.msra.mxu0 0.0
  %157 = vmatprep.subr.mxu0 0.0
  %158 = vmatpush1.msra.mxu0 0.0
  %159 = vmatprep.subr.mxu0 0.0
  %160 = vmatpush1.msra.mxu0 0.0
  %161 = vmatprep.subr.mxu0 0.0
  %162 = vmatpush1.msra.mxu0 0.0
  %163 = vmatprep.subr.mxu0 0.0
  %164 = vmatpush1.msra.mxu0 0.0
  %165 = vmatprep.subr.mxu0 0.0
  %166 = vmatpush1.msra.mxu0 0.0
  %167 = vmatprep.subr.mxu0 0.0
  %168 = vmatpush1.msra.mxu0 0.0
  %169 = vmatprep.subr.mxu0 0.0
  %170 = vmatpush1.msra.mxu0 0.0
  %171 = vmatprep.subr.mxu0 0.0
  %172 = vmatpush1.msra.mxu0 0.0
  %173 = vmatprep.subr.mxu0 0.0
  %174 = vmatpush1.msra.mxu0 0.0
  %175 = vmatprep.subr.mxu0 0.0
  %176 = vmatpush1.msra.mxu0 0.0
  %177 = vmatprep.subr.mxu0 0.0
  %178 = vmatpush1.msra.mxu0 0.0
  %179 = vmatprep.subr.mxu0 0.0
  %180 = vmatpush1.msra.mxu0 0.0
  %181 = vmatprep.subr.mxu0 0.0
  %182 = vmatpush1.msra.mxu0 0.0
  %183 = vmatprep.mubr.f32.mxu0 0.0
  %184 = vmatmul.mubr.f32.gmra.mrb[0].mxu0 %v117
  %v185 = vpop.f32.mrb[0].mxu0
  %v186 = vadd.f32 0.0, %v185
  %v187 = vpop.f32.mrb[0].mxu0
  %188 = vdwg.mxu0
  %v189 = vlaneseq
  %v190 = vand.u32 %v189, 127
  %vm191 = vcmp.lt.s32.totalorder %v190, 50
  %v192 = vld [vmem:[%s3 + $0x3] sm:$0x1]
  %v193 = vsel %vm191, %v186, 0.0
  %vm194 = vcmask 811008
  %v195 = vsel %vm194, %v193, 0.0
  %196 = vadd.xlane.f32.xlu0 %v195
  %v197 = vpop.xlane.xlu0 %196
  %v198 = vmul.f32 %v197, 0.02
  %v199 = vadd.f32 %v198, %v192
  %v200 = vsel %vm191, 0.0, %v186
  %v201 = vsel %vm194, %v200, 0.0
  %202 = vadd.xlane.f32.xlu0 %v201
  %v203 = vpop.xlane.xlu0 %202
  %v204 = vmul.f32 %v203, 0.02
  %v205 = vadd.f32 %v204, %v192
  %v206 = vlaneseq
  %v207 = vshrl.u32 %v206, 7
  %vm208 = vcmp.eq.s32.totalorder %v207, 0
  %v209 = vlaneseq
  %v210 = vshrl.u32 %v209, 7
  %v211 = vsub.s32 0, %v210
  %v212 = vrot.slane %v199, %v211
  %v213 = vlaneseq
  %v214 = vshrl.u32 %v213, 7
  %v215 = vsub.s32 0, %v214
  %v216 = vrot.slane %v205, %v215
  %v217 = vsel %vm208, %v212, %v216
  %vm218 = vcmp.gt.f32.partialorder %v217, 0.0
  %v219 = vsel %vm218, 1, 0
  %v220 = vcvt.s32.f32 %v219
  %v221 = vld [vmem:[%s1] sm:$0xff]
  %v222 = vld [vmem:[%s2] sm:$0xff]
  %v223 = vld [vmem:[%s2 + $0x8] sm:$0xff]
  %v224 = vld [vmem:[%s2 + $0x10] sm:$0xff]
  %v225 = vld [vmem:[%s2 + $0x18] sm:$0xff]
  %v226 = vld [vmem:[%s2 + $0x20] sm:$0xff]
  %v227 = vld [vmem:[%s2 + $0x28] sm:$0xff]
  %v228 = vld [vmem:[%s2 + $0x30] sm:$0xff]
  %v229 = vld [vmem:[%s2 + $0x38] sm:$0xff]
  %v230 = vld [vmem:[%s2 + $0x40] sm:$0xff]
  %v231 = vld [vmem:[%s2 + $0x48] sm:$0xff]
  %v232 = vld [vmem:[%s2 + $0x50] sm:$0xff]
  %v233 = vld [vmem:[%s2 + $0x58] sm:$0xff]
  %v234 = vld [vmem:[%s2 + $0x60] sm:$0xff]
  %v235 = vld [vmem:[%s2 + $0x68] sm:$0xff]
  %v236 = vld [vmem:[%s2 + $0x70] sm:$0xff]
  %v237 = vld [vmem:[%s2 + $0x78] sm:$0xff]
  %v238 = vld [vmem:[%s2 + $0x80] sm:$0xff]
  %v239 = vld [vmem:[%s2 + $0x88] sm:$0xff]
  %v240 = vld [vmem:[%s2 + $0x90] sm:$0xff]
  %v241 = vld [vmem:[%s2 + $0x98] sm:$0xff]
  %v242 = vld [vmem:[%s2 + $0xa0] sm:$0xff]
  %v243 = vld [vmem:[%s2 + $0xa8] sm:$0xff]
  %v244 = vld [vmem:[%s2 + $0xb0] sm:$0xff]
  %v245 = vld [vmem:[%s2 + $0xb8] sm:$0xff]
  %v246 = vld [vmem:[%s2 + $0xc0] sm:$0xff]
  %v247 = vld [vmem:[%s2 + $0xc8] sm:$0xff]
  %v248 = vld [vmem:[%s2 + $0xd0] sm:$0xff]
  %v249 = vld [vmem:[%s2 + $0xd8] sm:$0xff]
  %v250 = vld [vmem:[%s2 + $0xe0] sm:$0xff]
  %v251 = vld [vmem:[%s2 + $0xe8] sm:$0xff]
  %v252 = vld [vmem:[%s2 + $0xf0] sm:$0xff]
  %v253 = vld [vmem:[%s2 + $0xf8] sm:$0xff]
  %v254 = vld [vmem:[%s2 + $0x100] sm:$0xff]
  %v255 = vld [vmem:[%s2 + $0x108] sm:$0xff]
  %v256 = vld [vmem:[%s2 + $0x110] sm:$0xff]
  %v257 = vld [vmem:[%s2 + $0x118] sm:$0xff]
  %v258 = vld [vmem:[%s2 + $0x120] sm:$0xff]
  %v259 = vld [vmem:[%s2 + $0x128] sm:$0xff]
  %v260 = vld [vmem:[%s2 + $0x130] sm:$0xff]
  %v261 = vld [vmem:[%s2 + $0x138] sm:$0xff]
  %v262 = vld [vmem:[%s2 + $0x140] sm:$0xff]
  %v263 = vld [vmem:[%s2 + $0x148] sm:$0xff]
  %v264 = vld [vmem:[%s2 + $0x150] sm:$0xff]
  %v265 = vld [vmem:[%s2 + $0x158] sm:$0xff]
  %v266 = vld [vmem:[%s2 + $0x160] sm:$0xff]
  %v267 = vld [vmem:[%s2 + $0x168] sm:$0xff]
  %v268 = vld [vmem:[%s2 + $0x170] sm:$0xff]
  %v269 = vld [vmem:[%s2 + $0x178] sm:$0xff]
  %v270 = vld [vmem:[%s2 + $0x180] sm:$0xff]
  %v271 = vld [vmem:[%s2 + $0x188] sm:$0xff]
  %v272 = vld [vmem:[%s3] sm:$0x1]
  %v273 = vlaneseq
  %v274 = vshrl.u32 %v273, 7
  %v275 = vsub.s32 0, %v274
  %v276 = vrot.slane %v272, %v275
  %v278 = vcombine.high %v221, %v221
  %v280 = vunpack.c.l.s4 1983009808
  %v281 = vunpack.c.0.s8 %v280
  %v282 = vlaneseq
  %v283 = vshrl.u32 %v282, 7
  %v284 = vsub.s32 %v281, %v283
  %v285 = vrot.slane %v221, %v284
  %v287 = vunpack.c.l.s4 1983009808
  %v288 = vunpack.c.0.s8 %v287
  %v289 = vlaneseq
  %v290 = vshrl.u32 %v289, 7
  %v291 = vsub.s32 %v288, %v290
  %v292 = vrot.slane %v278, %v291
  %v293 = vcombine.high %v285, %v285
  %v294 = vcombine.high %v292, %v292
  %v298 = vsel %vm115, %v294, 0
  %300 = vmatprep.subr.mxu0 0.0
  %301 = vmatpush1.msra.mxu0 %v222
  %302 = vmatprep.subr.mxu0 0.0
  %303 = vmatpush1.msra.mxu0 %v223
  %304 = vmatprep.subr.mxu0 0.0
  %305 = vmatpush1.msra.mxu0 %v224
  %306 = vmatprep.subr.mxu0 0.0
  %307 = vmatpush1.msra.mxu0 %v225
  %308 = vmatprep.subr.mxu0 0.0
  %309 = vmatpush1.msra.mxu0 %v226
  %310 = vmatprep.subr.mxu0 0.0
  %311 = vmatpush1.msra.mxu0 %v227
  %312 = vmatprep.subr.mxu0 0.0
  %313 = vmatpush1.msra.mxu0 %v228
  %314 = vmatprep.subr.mxu0 0.0
  %315 = vmatpush1.msra.mxu0 %v229
  %316 = vmatprep.subr.mxu0 0.0
  %317 = vmatpush1.msra.mxu0 %v230
  %318 = vmatprep.subr.mxu0 0.0
  %319 = vmatpush1.msra.mxu0 %v231
  %320 = vmatprep.subr.mxu0 0.0
  %321 = vmatpush1.msra.mxu0 %v232
  %322 = vmatprep.subr.mxu0 0.0
  %323 = vmatpush1.msra.mxu0 %v233
  %324 = vmatprep.subr.mxu0 0.0
  %325 = vmatpush1.msra.mxu0 %v234
  %326 = vmatprep.subr.mxu0 0.0
  %327 = vmatpush1.msra.mxu0 %v235
  %328 = vmatprep.subr.mxu0 0.0
  %329 = vmatpush1.msra.mxu0 %v236
  %330 = vmatprep.subr.mxu0 0.0
  %331 = vmatpush1.msra.mxu0 %v237
  %332 = vmatprep.subr.mxu0 0.0
  %333 = vmatpush1.msra.mxu0 %v238
  %334 = vmatprep.subr.mxu0 0.0
  %335 = vmatpush1.msra.mxu0 %v239
  %336 = vmatprep.subr.mxu0 0.0
  %337 = vmatpush1.msra.mxu0 %v240
  %338 = vmatprep.subr.mxu0 0.0
  %339 = vmatpush1.msra.mxu0 %v241
  %340 = vmatprep.subr.mxu0 0.0
  %341 = vmatpush1.msra.mxu0 %v242
  %342 = vmatprep.subr.mxu0 0.0
  %343 = vmatpush1.msra.mxu0 %v243
  %344 = vmatprep.subr.mxu0 0.0
  %345 = vmatpush1.msra.mxu0 %v244
  %346 = vmatprep.subr.mxu0 0.0
  %347 = vmatpush1.msra.mxu0 %v245
  %348 = vmatprep.subr.mxu0 0.0
  %349 = vmatpush1.msra.mxu0 %v246
  %350 = vmatprep.subr.mxu0 0.0
  %351 = vmatpush1.msra.mxu0 %v247
  %352 = vmatprep.subr.mxu0 0.0
  %353 = vmatpush1.msra.mxu0 %v248
  %354 = vmatprep.subr.mxu0 0.0
  %355 = vmatpush1.msra.mxu0 %v249
  %356 = vmatprep.subr.mxu0 0.0
  %357 = vmatpush1.msra.mxu0 %v250
  %358 = vmatprep.subr.mxu0 0.0
  %359 = vmatpush1.msra.mxu0 %v251
  %360 = vmatprep.subr.mxu0 0.0
  %361 = vmatpush1.msra.mxu0 %v252
  %362 = vmatprep.subr.mxu0 0.0
  %363 = vmatpush1.msra.mxu0 %v253
  %364 = vmatprep.mubr.f32.mxu0 %v293
  %365 = vmatmul.mubr.f32.gmra.mrb[0].mxu0 %v285
  %v366 = vpop.f32.mrb[0].mxu0
  %v367 = vadd.f32 %v276, %v366
  %v368 = vpop.f32.mrb[0].mxu0
  %369 = vdwg.mxu0
  %370 = vmatprep.subr.mxu0 0.0
  %371 = vmatpush1.msra.mxu0 %v254
  %372 = vmatprep.subr.mxu0 0.0
  %373 = vmatpush1.msra.mxu0 %v255
  %374 = vmatprep.subr.mxu0 0.0
  %375 = vmatpush1.msra.mxu0 %v256
  %376 = vmatprep.subr.mxu0 0.0
  %377 = vmatpush1.msra.mxu0 %v257
  %378 = vmatprep.subr.mxu0 0.0
  %379 = vmatpush1.msra.mxu0 %v258
  %380 = vmatprep.subr.mxu0 0.0
  %381 = vmatpush1.msra.mxu0 %v259
  %382 = vmatprep.subr.mxu0 0.0
  %383 = vmatpush1.msra.mxu0 %v260
  %384 = vmatprep.subr.mxu0 0.0
  %385 = vmatpush1.msra.mxu0 %v261
  %386 = vmatprep.subr.mxu0 0.0
  %387 = vmatpush1.msra.mxu0 %v262
  %388 = vmatprep.subr.mxu0 0.0
  %389 = vmatpush1.msra.mxu0 %v263
  %390 = vmatprep.subr.mxu0 0.0
  %391 = vmatpush1.msra.mxu0 %v264
  %392 = vmatprep.subr.mxu0 0.0
  %393 = vmatpush1.msra.mxu0 %v265
  %394 = vmatprep.subr.mxu0 0.0
  %395 = vmatpush1.msra.mxu0 %v266
  %396 = vmatprep.subr.mxu0 0.0
  %397 = vmatpush1.msra.mxu0 %v267
  %398 = vmatprep.subr.mxu0 0.0
  %399 = vmatpush1.msra.mxu0 %v268
  %400 = vmatprep.subr.mxu0 0.0
  %401 = vmatpush1.msra.mxu0 %v269
  %402 = vmatprep.subr.mxu0 0.0
  %403 = vmatpush1.msra.mxu0 %v270
  %404 = vmatprep.subr.mxu0 0.0
  %405 = vmatpush1.msra.mxu0 %v271
  %406 = vmatprep.subr.mxu0 0.0
  %407 = vmatpush1.msra.mxu0 0.0
  %408 = vmatprep.subr.mxu0 0.0
  %409 = vmatpush1.msra.mxu0 0.0
  %410 = vmatprep.subr.mxu0 0.0
  %411 = vmatpush1.msra.mxu0 0.0
  %412 = vmatprep.subr.mxu0 0.0
  %413 = vmatpush1.msra.mxu0 0.0
  %414 = vmatprep.subr.mxu0 0.0
  %415 = vmatpush1.msra.mxu0 0.0
  %416 = vmatprep.subr.mxu0 0.0
  %417 = vmatpush1.msra.mxu0 0.0
  %418 = vmatprep.subr.mxu0 0.0
  %419 = vmatpush1.msra.mxu0 0.0
  %420 = vmatprep.subr.mxu0 0.0
  %421 = vmatpush1.msra.mxu0 0.0
  %422 = vmatprep.subr.mxu0 0.0
  %423 = vmatpush1.msra.mxu0 0.0
  %424 = vmatprep.subr.mxu0 0.0
  %425 = vmatpush1.msra.mxu0 0.0
  %426 = vmatprep.subr.mxu0 0.0
  %427 = vmatpush1.msra.mxu0 0.0
  %428 = vmatprep.subr.mxu0 0.0
  %429 = vmatpush1.msra.mxu0 0.0
  %430 = vmatprep.subr.mxu0 0.0
  %431 = vmatpush1.msra.mxu0 0.0
  %432 = vmatprep.subr.mxu0 0.0
  %433 = vmatpush1.msra.mxu0 0.0
  %434 = vmatprep.mubr.f32.mxu0 %v298
  %435 = vmatmul.mubr.f32.gmra.mrb[0].mxu0 %v292
  %v436 = vpop.f32.mrb[0].mxu0
  %v437 = vadd.f32 %v367, %v436
  %v438 = vpop.f32.mrb[0].mxu0
  %439 = vdwg.mxu0
  %v440 = vmax.f32 %v437, 0.0
  %v441 = vld [vmem:[%s3 + $0x1] sm:$0x1]
  %v442 = vlaneseq
  %v443 = vshrl.u32 %v442, 7
  %v444 = vsub.s32 0, %v443
  %v445 = vrot.slane %v441, %v444
  %v446 = vmul.f32 %v440, %v445
  %vm447 = vcmask 517120
  %v448 = vsel %vm447, %v446, 0.0
  %449 = vadd.xlane.f32.xlu0 %v448
  %v450 = vpop.xlane.xlu0 %449
  %v451 = vld [vmem:[%s3 + $0x3] sm:$0x1]
  %v452 = vlaneseq
  %v453 = vshrl.u32 %v452, 7
  %v454 = vsub.s32 0, %v453
  %v455 = vrot.slane %v451, %v454
  %v456 = vadd.f32 %v450, %v455
  %v457 = vld [vmem:[%s3 + $0x2] sm:$0x1]
  %v458 = vlaneseq
  %v459 = vshrl.u32 %v458, 7
  %v460 = vsub.s32 0, %v459
  %v461 = vrot.slane %v457, %v460
  %v462 = vmul.f32 %v440, %v461
  %v463 = vsel %vm447, %v462, 0.0
  %464 = vadd.xlane.f32.xlu0 %v463
  %v465 = vpop.xlane.xlu0 %464
  %v466 = vadd.f32 %v465, %v455
  %468 = vrot.lane.b32.xlu0 %v456, 2
  %v469 = vpop.permute.xlu0 %468
  %v471 = vmul.f32 %v220, %v469
  %v472 = vsub.f32 1.0, %v220
  %474 = vrot.lane.b32.xlu0 %v466, 1
  %v475 = vpop.permute.xlu0 %474
  %v477 = vmul.f32 %v472, %v475
  %v478 = vadd.f32 %v471, %v477
  %480 = vset.pattern.permute.xlu0 2
  %481 = vperm.xlu0 %480, %v478
  %v482 = vpop.permute.xlu0 %481
  %484 = vst [vmem:[%s4] sm:$0x3] %v482
  // Predicated region
  $region18: #{hybrid_forward.1} parent=0 // pred_check
    _
  $region19: #{hybrid_forward.1} parent=0 // pred_check_branch
    %486 = sbr.rel (0) target = $region21
  $region20: #{hybrid_forward.1} parent=0 // pred_region
    _
  $region21: #{hybrid_forward.1} parent=0 // pred_fallthru
    _
  // Predicated region
  $region22: #{hybrid_forward.1} parent=0 // pred_check
    _
  $region23: #{hybrid_forward.1} parent=0 // pred_check_branch
    %488 = sbr.rel (0) target = $region25
  $region24: #{hybrid_forward.1} parent=0 // pred_region
    _
  $region25: #{hybrid_forward.1} parent=0 // pred_fallthru
    _

</llo_original>
